<compile_context>
chip_gen: v5e
topology: v5e:2x2
jax: 0.10.0
libtpu: 0.0.40
codegen_flags: <defaults>
</compile_context>

<pallas_src>
import functools

import numpy as np
import jax
import jax.numpy as jnp
from jax import lax
from jax.experimental import pallas as pl
from jax.experimental.pallas import tpu as pltpu


LANES = 128
SUBLANES = 8
UNROLL = 8          # hand-unroll factor of the table-entry loop
GROUP_ROWS = 32     # rows processed per register-resident group (4 vregs)


def _round_up(x: int, m: int) -> int:
    return ((x + m - 1) // m) * m


# ----------------------------------------------------------------------------
# Host-side schedule construction (deterministic numpy; mirrors PyTorch __init__).
# ----------------------------------------------------------------------------
def cosine_beta_schedule(timesteps, s=0.008, raise_to_power: float = 1):
    steps = timesteps + 2
    x = np.linspace(0, steps, steps)
    alphas_cumprod = np.cos((x / steps + s) / (1 + s) * np.pi * 0.5) ** 2
    alphas_cumprod = alphas_cumprod / alphas_cumprod[0]
    betas = 1 - alphas_cumprod[1:] / alphas_cumprod[:-1]
    betas = np.clip(betas, a_min=0, a_max=0.999)
    alphas = 1.0 - betas
    alphas_cumprod = np.cumprod(alphas, axis=0)
    if raise_to_power != 1:
        alphas_cumprod = np.power(alphas_cumprod, raise_to_power)
    return alphas_cumprod


def clip_noise_schedule(alphas2, clip_value=0.001):
    alphas2 = np.concatenate([np.ones(1), alphas2], axis=0)
    alphas_step = alphas2[1:] / alphas2[:-1]
    alphas_step = np.clip(alphas_step, a_min=clip_value, a_max=1.0)
    alphas2 = np.cumprod(alphas_step, axis=0)
    return alphas2


def polynomial_schedule(timesteps: int, s=0.0001, power=3.0):
    steps = timesteps + 1
    x = np.linspace(0, steps, steps)
    alphas2 = (1 - np.power(x / steps, power)) ** 2
    alphas2 = clip_noise_schedule(alphas2, clip_value=0.001)
    precision = 1 - 2 * s
    alphas2 = precision * alphas2 + s
    return alphas2


def build_gamma_table(noise_schedule: str = "polynomial_2",
                      timesteps: int = 1000,
                      precision: float = 1e-05) -> np.ndarray:
    if noise_schedule == "cosine":
        alphas2 = cosine_beta_schedule(timesteps)
    elif "polynomial" in noise_schedule:
        splits = noise_schedule.split("_")
        assert len(splits) == 2
        power = float(splits[1])
        alphas2 = polynomial_schedule(timesteps, s=precision, power=power)
    else:
        raise ValueError(noise_schedule)
    sigmas2 = 1 - alphas2
    log_alphas2 = np.log(alphas2)
    log_sigmas2 = np.log(sigmas2)
    log_alphas2_to_sigmas2 = log_alphas2 - log_sigmas2
    gamma = (-log_alphas2_to_sigmas2).astype(np.float32)  # (timesteps + 1,)
    return gamma


# ----------------------------------------------------------------------------
# Pallas kernel: round + clip + SMEM-table gather via running compare/select.
# ----------------------------------------------------------------------------
def gamma_lookup_kernel(gamma_ref, t_ref, out_ref, *, timesteps: int, group_rows: int):
    # gamma_ref: (P,)       float32 in SMEM (compact table, scalar reads)
    # t_ref:     (RB, 128)  float32, lane-dense block of t values
    # out_ref:   (RB, 128)  float32
    rb = t_ref.shape[0]
    p_total = timesteps + 1
    n_main = (p_total // UNROLL) * UNROLL

    # Row-group loop: each group's idx/acc (<= 4 vregs each) stays register-resident
    # across the whole table sweep; each group ends with dense (group, 128) stores.
    for g in range(0, rb, group_rows):
        gr = min(group_rows, rb - g)
        t_g = t_ref[g:g + gr, :]
        # torch.round == round-half-to-even == jnp.round; clip keeps stray t outside
        # [0, 1] mapped to a valid table entry.
        idx_g = jnp.clip(jnp.round(t_g * float(timesteps)).astype(jnp.int32),
                         0, timesteps)

        def body(i, acc, idx_g=idx_g):
            p0 = i * UNROLL
            for u in range(UNROLL):                       # hand-unrolled inner loop
                p = p0 + u
                # exactly one entry matches per element; acc starts at 0, so the
                # running select is equivalent to select-then-sum without the adds.
                acc = jnp.where(idx_g == p, gamma_ref[p], acc)
            return acc

        acc = jnp.zeros((gr, LANES), jnp.float32)
        acc = lax.fori_loop(0, n_main // UNROLL, body, acc)
        for p in range(n_main, p_total):                   # static tail (< UNROLL)
            acc = jnp.where(idx_g == p, gamma_ref[p], acc)

        out_ref[g:g + gr, :] = acc                          # dense, sublane-aligned


# ----------------------------------------------------------------------------
# Wrapper: lane-dense slab layout, row-block grid, un-padding.
# ----------------------------------------------------------------------------
def predefined_noise_schedule_forward(t: jnp.ndarray,
                                      gamma_table: jnp.ndarray,
                                      timesteps: int,
                                      block_rows: int = 128) -> jnp.ndarray:
    orig_shape = t.shape
    flat = t.reshape(-1).astype(jnp.float32)
    n = flat.shape[0]

    # Lane-dense slab, sublane-aligned rows.
    rows = max(1, pl.cdiv(n, LANES))
    rows = _round_up(rows, SUBLANES)

    # Block-row sizing: big enough to amortize per-grid-step overhead, but keep
    # >= 2 grid steps when there is enough work so both v7x TensorCores engage.
    br = min(_round_up(block_rows, SUBLANES), rows)
    if rows >= 2 * SUBLANES and br > rows // 2:
        br = _round_up(pl.cdiv(rows, 2), SUBLANES)
    rows_pad = _round_up(rows, br)
    grid = rows_pad // br

    flat_pad = jnp.pad(flat, (0, rows_pad * LANES - n))     # pad -> idx 0 (ignored)
    slab = flat_pad.reshape(rows_pad, LANES)

    group = min(GROUP_ROWS, br)

    out = pl.pallas_call(
        functools.partial(gamma_lookup_kernel, timesteps=timesteps, group_rows=group),
        out_shape=jax.ShapeDtypeStruct((rows_pad, LANES), jnp.float32),
        grid_spec=pltpu.PrefetchScalarGridSpec(
            num_scalar_prefetch=0,
            grid=(grid,),
            in_specs=[
                # Compact gamma table -> SMEM (4 KiB); scalar reads inside the kernel.
                pl.BlockSpec(memory_space=pltpu.MemorySpace.SMEM),
                # t slab block (lane-dense).
                pl.BlockSpec((br, LANES), lambda i: (i, 0)),
            ],
            out_specs=pl.BlockSpec((br, LANES), lambda i: (i, 0)),
        ),
        compiler_params=pltpu.CompilerParams(
            dimension_semantics=("parallel",)),
    )(gamma_table, slab)

    return out.reshape(-1)[:n].reshape(orig_shape)


if __name__ == "__main__":
    timesteps = 1000
    gamma_np = build_gamma_table("polynomial_2", timesteps=timesteps, precision=1e-05)
    gamma_dev = jnp.asarray(gamma_np)                        # (timesteps + 1,) f32

    def reference(t_arr):
        t_np = np.asarray(t_arr)
        idx = np.clip(np.round(t_np * timesteps).astype(np.int64), 0, timesteps)
        return gamma_np[idx]

    key = jax.random.PRNGKey(0)

    # Small case matching the module's typical use: per-sample t in [0, 1], shape (8, 1).
    t_small = jax.random.uniform(key, (8, 1), dtype=jnp.float32, minval=0.0, maxval=1.0)
    out_small = jax.block_until_ready(
        predefined_noise_schedule_forward(t_small, gamma_dev, timesteps))
    assert out_small.shape == t_small.shape
    np.testing.assert_allclose(np.asarray(out_small), reference(t_small),
                               rtol=1e-6, atol=1e-6)

    # Larger case to exercise the multi-block / megacore grid path (grid >= 2).
    key2 = jax.random.PRNGKey(1)
    t_large = jax.random.uniform(key2, (2048, 1), dtype=jnp.float32, minval=0.0, maxval=1.0)
    out_large = jax.block_until_ready(
        predefined_noise_schedule_forward(t_large, gamma_dev, timesteps))
    assert out_large.shape == t_large.shape
    np.testing.assert_allclose(np.asarray(out_large), reference(t_large),
                               rtol=1e-6, atol=1e-6)

    print("KERNEL_OK")
</pallas_src>

<mosaic_0001>
module attributes {stable_mosaic.version = 11 : i64} {
  func.func @gamma_lookup_kernel(%arg0: i32, %arg1: memref<1001xf32, #tpu.memory_space<smem>>, %arg2: memref<8x128xf32, #tpu.memory_space<vmem>>, %arg3: memref<8x128xf32, #tpu.memory_space<vmem>>) attributes {dimension_semantics = [#tpu.dimension_semantics<parallel>], iteration_bounds = array<i64: 1>, scalar_prefetch = 0 : i64, scratch_operands = 0 : i64, tpu.core_type = #tpu.core_type<tc>, window_params = [{transform_indices = @transform_0, window_bounds = array<i64: 1001>}, {transform_indices = @transform_1, window_bounds = array<i64: 8, 128>}, {transform_indices = @transform_2, window_bounds = array<i64: 8, 128>}]} {
    %c0 = arith.constant 0 : index
    %c0_0 = arith.constant 0 : index
    %0 = vector.load %arg2[%c0, %c0_0] : memref<8x128xf32, #tpu.memory_space<vmem>>, vector<8x128xf32>
    %cst = arith.constant 1.000000e+03 : f32
    %1 = vector.broadcast %cst : f32 to vector<8x128xf32>
    %2 = arith.mulf %0, %1 : vector<8x128xf32>
    %3 = math.roundeven %2 : vector<8x128xf32>
    %4 = arith.fptosi %3 : vector<8x128xf32> to vector<8x128xi32>
    %c0_i32 = arith.constant 0 : i32
    %c1000_i32 = arith.constant 1000 : i32
    %5 = vector.broadcast %c0_i32 : i32 to vector<8x128xi32>
    %6 = arith.maxsi %5, %4 : vector<8x128xi32>
    %7 = vector.broadcast %c1000_i32 : i32 to vector<8x128xi32>
    %8 = arith.minsi %7, %6 : vector<8x128xi32>
    %cst_1 = arith.constant 0.000000e+00 : f32
    %9 = vector.broadcast %cst_1 : f32 to vector<8x128xf32>
    %c0_i32_2 = arith.constant 0 : i32
    %c125_i32 = arith.constant 125 : i32
    %10 = arith.addi %c0_i32_2, %c125_i32 : i32
    %c1_i32 = arith.constant 1 : i32
    %11 = scf.for %arg4 = %c0_i32_2 to %10 step %c1_i32 iter_args(%arg5 = %9) -> (vector<8x128xf32>)  : i32 {
      %c8_i32 = arith.constant 8 : i32
      %18 = arith.muli %arg4, %c8_i32 : i32
      %c0_i32_7 = arith.constant 0 : i32
      %19 = arith.addi %18, %c0_i32_7 : i32
      %20 = vector.broadcast %19 : i32 to vector<8x128xi32>
      %21 = arith.cmpi eq, %8, %20 : vector<8x128xi32>
      %22 = arith.index_cast %19 : i32 to index
      %23 = memref.load %arg1[%22] : memref<1001xf32, #tpu.memory_space<smem>>
      %24 = vector.broadcast %23 : f32 to vector<8x128xf32>
      %25 = arith.select %21, %24, %arg5 : vector<8x128xi1>, vector<8x128xf32>
      %c1_i32_8 = arith.constant 1 : i32
      %26 = arith.addi %18, %c1_i32_8 : i32
      %27 = vector.broadcast %26 : i32 to vector<8x128xi32>
      %28 = arith.cmpi eq, %8, %27 : vector<8x128xi32>
      %29 = arith.index_cast %26 : i32 to index
      %30 = memref.load %arg1[%29] : memref<1001xf32, #tpu.memory_space<smem>>
      %31 = vector.broadcast %30 : f32 to vector<8x128xf32>
      %32 = arith.select %28, %31, %25 : vector<8x128xi1>, vector<8x128xf32>
      %c2_i32 = arith.constant 2 : i32
      %33 = arith.addi %18, %c2_i32 : i32
      %34 = vector.broadcast %33 : i32 to vector<8x128xi32>
      %35 = arith.cmpi eq, %8, %34 : vector<8x128xi32>
      %36 = arith.index_cast %33 : i32 to index
      %37 = memref.load %arg1[%36] : memref<1001xf32, #tpu.memory_space<smem>>
      %38 = vector.broadcast %37 : f32 to vector<8x128xf32>
      %39 = arith.select %35, %38, %32 : vector<8x128xi1>, vector<8x128xf32>
      %c3_i32 = arith.constant 3 : i32
      %40 = arith.addi %18, %c3_i32 : i32
      %41 = vector.broadcast %40 : i32 to vector<8x128xi32>
      %42 = arith.cmpi eq, %8, %41 : vector<8x128xi32>
      %43 = arith.index_cast %40 : i32 to index
      %44 = memref.load %arg1[%43] : memref<1001xf32, #tpu.memory_space<smem>>
      %45 = vector.broadcast %44 : f32 to vector<8x128xf32>
      %46 = arith.select %42, %45, %39 : vector<8x128xi1>, vector<8x128xf32>
      %c4_i32 = arith.constant 4 : i32
      %47 = arith.addi %18, %c4_i32 : i32
      %48 = vector.broadcast %47 : i32 to vector<8x128xi32>
      %49 = arith.cmpi eq, %8, %48 : vector<8x128xi32>
      %50 = arith.index_cast %47 : i32 to index
      %51 = memref.load %arg1[%50] : memref<1001xf32, #tpu.memory_space<smem>>
      %52 = vector.broadcast %51 : f32 to vector<8x128xf32>
      %53 = arith.select %49, %52, %46 : vector<8x128xi1>, vector<8x128xf32>
      %c5_i32 = arith.constant 5 : i32
      %54 = arith.addi %18, %c5_i32 : i32
      %55 = vector.broadcast %54 : i32 to vector<8x128xi32>
      %56 = arith.cmpi eq, %8, %55 : vector<8x128xi32>
      %57 = arith.index_cast %54 : i32 to index
      %58 = memref.load %arg1[%57] : memref<1001xf32, #tpu.memory_space<smem>>
      %59 = vector.broadcast %58 : f32 to vector<8x128xf32>
      %60 = arith.select %56, %59, %53 : vector<8x128xi1>, vector<8x128xf32>
      %c6_i32 = arith.constant 6 : i32
      %61 = arith.addi %18, %c6_i32 : i32
      %62 = vector.broadcast %61 : i32 to vector<8x128xi32>
      %63 = arith.cmpi eq, %8, %62 : vector<8x128xi32>
      %64 = arith.index_cast %61 : i32 to index
      %65 = memref.load %arg1[%64] : memref<1001xf32, #tpu.memory_space<smem>>
      %66 = vector.broadcast %65 : f32 to vector<8x128xf32>
      %67 = arith.select %63, %66, %60 : vector<8x128xi1>, vector<8x128xf32>
      %c7_i32 = arith.constant 7 : i32
      %68 = arith.addi %18, %c7_i32 : i32
      %69 = vector.broadcast %68 : i32 to vector<8x128xi32>
      %70 = arith.cmpi eq, %8, %69 : vector<8x128xi32>
      %71 = arith.index_cast %68 : i32 to index
      %72 = memref.load %arg1[%71] : memref<1001xf32, #tpu.memory_space<smem>>
      %73 = vector.broadcast %72 : f32 to vector<8x128xf32>
      %74 = arith.select %70, %73, %67 : vector<8x128xi1>, vector<8x128xf32>
      scf.yield %74 : vector<8x128xf32>
    }
    %c125_i32_3 = arith.constant 125 : i32
    %c1000_i32_4 = arith.constant 1000 : i32
    %12 = vector.broadcast %c1000_i32_4 : i32 to vector<8x128xi32>
    %13 = arith.cmpi eq, %8, %12 : vector<8x128xi32>
    %c1000 = arith.constant 1000 : index
    %14 = memref.load %arg1[%c1000] : memref<1001xf32, #tpu.memory_space<smem>>
    %15 = vector.broadcast %14 : f32 to vector<8x128xf32>
    %16 = arith.select %13, %15, %11 : vector<8x128xi1>, vector<8x128xf32>
    %c0_5 = arith.constant 0 : index
    %c0_6 = arith.constant 0 : index
    %17 = vector.load %arg3[%c0_5, %c0_6] : memref<8x128xf32, #tpu.memory_space<vmem>>, vector<8x128xf32>
    tpu.vector_store %arg3[%c0_5, %c0_6], %16 {strides = array<i32>} : memref<8x128xf32, #tpu.memory_space<vmem>>, vector<8x128xf32>,
    return
  }
  func.func @transform_0(%arg0: i32) -> i32 {
    %c0_i32 = arith.constant 0 : i32
    %c0_i32_0 = arith.constant 0 : i32
    return %c0_i32 : i32
  }
  func.func @transform_1(%arg0: i32) -> (i32, i32) {
    %c0_i32 = arith.constant 0 : i32
    %c0_i32_0 = arith.constant 0 : i32
    return %arg0, %c0_i32 : i32, i32
  }
  func.func @transform_2(%arg0: i32) -> (i32, i32) {
    %c0_i32 = arith.constant 0 : i32
    %c0_i32_0 = arith.constant 0 : i32
    return %arg0, %c0_i32 : i32, i32
  }
}

</mosaic_0001>

<llo_original>
// kernel: tpu_custom_call.1
$region0: #{tpu_custom_call.1}
  #allocation0 [shape = 'u32[]', space=smem, size = 0x4, offset = 0x4, fixed_abs, tag = 'smem constant byte address 0x4 - core index']
  #allocation1 [shape = 'u32[72,128]{1,0:T(1,128)}', space=vmem, size = 0x9000, scoped, tag = 'internal scratch']
  %s0 = inlined_call_operand.hbm [shape: f32[1001], index: 0, kind: input, shape index: {}]
  %s1 = inlined_call_operand.hbm [shape: f32[8,128], index: 1, kind: input, shape index: {}]
  %s2 = inlined_call_operand.hbm [shape: f32[8,128], index: 2, kind: output, shape index: {}]
  %s3 = sld [smem:[#allocation0]]
  $region33: #{tpu_custom_call.1} parent=0
    _
  %s5 = ssub.s32 1, %s3
  %s6 = scalar_select 0, %s5, %s3
  $region1: #{tpu_custom_call.1} parent=0
    #allocation2 [shape = 'u8[4096]{0}', space=smem, size = 0x1000, scoped, tag = 'input window, operand 0, single buffered']
    #allocation3 [shape = 's32[1]{0}', space=sflag, size = 0x4, scoped, tag = 'scoped memory for tpu_custom_call.1']
    #allocation4 [shape = 's32[1]{0}', space=sflag, size = 0x4, scoped, tag = 'scoped memory for tpu_custom_call.1']
    #allocation5 [shape = 's32[1]{0}', space=sflag, size = 0x4, scoped, tag = 'scoped memory for tpu_custom_call.1']
    #allocation6 [shape = 'u8[4096]{0}', space=vmem, size = 0x1000, scoped, tag = 'input window, operand 1, single buffered']
    #allocation7 [shape = 'u8[4096]{0}', space=vmem, size = 0x1000, scoped, tag = 'output window, operand 0, single buffered']
    %7 = vsyncpa [#allocation5], 0
    %8 = vsyncpa [#allocation3], 0
    %9 = vsyncpa [#allocation4], 0
    // Predicated region
    $region2: #{tpu_custom_call.1} parent=1 // pred_check
      _
    $region3: #{tpu_custom_call.1} parent=1 // pred_check_branch
      %11 = sbr.rel (0) target = $region5
    $region4: #{tpu_custom_call.1} parent=1 // pred_region
      %13 = vsyncadd [#allocation5], 0
      %s15 = sshll.u32 %s0, 4
      %s16 = int_to_ptr.hbm [resolvable:$true] %s15
      %18 = dma.hbm_to_smem %s16, 128, [#allocation2], [#allocation5]
    $region5: #{tpu_custom_call.1} parent=1 // pred_fallthru
      _
    // Predicated region
    $region6: #{tpu_custom_call.1} parent=1 // pred_check
      _
    $region7: #{tpu_custom_call.1} parent=1 // pred_check_branch
      %20 = sbr.rel (0) target = $region9
    $region8: #{tpu_custom_call.1} parent=1 // pred_region
      %22 = vsyncadd [#allocation3], 0
      %s24 = sshll.u32 %s1, 4
      %s25 = int_to_ptr.hbm [resolvable:$true] %s24
      %s26 = sshll.u32 [#allocation6], 4
      %s27 = int_to_ptr.vmem [resolvable:$true] %s26
      %29 = dma.hbm_to_vmem [thread:$0]  %s25, 128, %s27, [#allocation3]
    $region9: #{tpu_custom_call.1} parent=1 // pred_fallthru
      _
    // Predicated region
    $region10: #{tpu_custom_call.1} parent=1 // pred_check
      _
    $region11: #{tpu_custom_call.1} parent=1 // pred_check_branch
      %31 = sbr.rel (0) target = $region13
    $region12: #{tpu_custom_call.1} parent=1 // pred_region
      %33 = dma.done [#allocation5], 128
    $region13: #{tpu_custom_call.1} parent=1 // pred_fallthru
      _
    // Predicated region
    $region14: #{tpu_custom_call.1} parent=1 // pred_check
      _
    $region15: #{tpu_custom_call.1} parent=1 // pred_check_branch
      %35 = sbr.rel (0) target = $region17
    $region16: #{tpu_custom_call.1} parent=1 // pred_region
      %37 = dma.done [#allocation3], 128
    $region17: #{tpu_custom_call.1} parent=1 // pred_fallthru
      _
    %38 = sfence
    %v39 = vld [vmem:[#allocation6] sm:$0xff]
    %v40 = vmul.f32 %v39, 1000.0
    %v41 = vcvt.f32.s32.ties.to.even %v40
    %vm42 = vcmp.gt.s32.totalorder %v41, 0
    %v43 = vsel %vm42, %v41, 0
    %vm44 = vcmp.lt.s32.totalorder %v43, 1000
    %v45 = vsel %vm44, %v43, 1000
    loop: start=0, step=1, limit=125
    $region18: #{tpu_custom_call.1} parent=1 // loop_pre_header
      _
    $region19: #{tpu_custom_call.1} parent=1 // loop_header
      %s47 = sphi 0, %s51
      %p48 = scmp.ge.s32.totalorder %s47, 125
      %v52 = vphi 0.0, %v100
    $region20: #{tpu_custom_call.1} parent=1 // loop_header_branch
      %50 = sbr.rel (%p48) target = $region24
    $region21: #{tpu_custom_call.1} parent=1 // loop_body
      %s53 = smul.u32 %s47, 8
      %v54 = vstv %s53
      %vm55 = vcmp.eq.s32.totalorder %v45, %v54
      %s56 = sld [smem:[#allocation2 + %s53]]
      %v57 = vstv %s56
      %v58 = vsel %vm55, %v57, %v52
      %s59 = sadd.s32 %s53, 1
      %v60 = vstv %s59
      %vm61 = vcmp.eq.s32.totalorder %v45, %v60
      %s62 = sld [smem:[#allocation2 + %s59]]
      %v63 = vstv %s62
      %v64 = vsel %vm61, %v63, %v58
      %s65 = sadd.s32 %s53, 2
      %v66 = vstv %s65
      %vm67 = vcmp.eq.s32.totalorder %v45, %v66
      %s68 = sld [smem:[#allocation2 + %s65]]
      %v69 = vstv %s68
      %v70 = vsel %vm67, %v69, %v64
      %s71 = sadd.s32 %s53, 3
      %v72 = vstv %s71
      %vm73 = vcmp.eq.s32.totalorder %v45, %v72
      %s74 = sld [smem:[#allocation2 + %s71]]
      %v75 = vstv %s74
      %v76 = vsel %vm73, %v75, %v70
      %s77 = sadd.s32 %s53, 4
      %v78 = vstv %s77
      %vm79 = vcmp.eq.s32.totalorder %v45, %v78
      %s80 = sld [smem:[#allocation2 + %s77]]
      %v81 = vstv %s80
      %v82 = vsel %vm79, %v81, %v76
      %s83 = sadd.s32 %s53, 5
      %v84 = vstv %s83
      %vm85 = vcmp.eq.s32.totalorder %v45, %v84
      %s86 = sld [smem:[#allocation2 + %s83]]
      %v87 = vstv %s86
      %v88 = vsel %vm85, %v87, %v82
      %s89 = sadd.s32 %s53, 6
      %v90 = vstv %s89
      %vm91 = vcmp.eq.s32.totalorder %v45, %v90
      %s92 = sld [smem:[#allocation2 + %s89]]
      %v93 = vstv %s92
      %v94 = vsel %vm91, %v93, %v88
      %s95 = sadd.s32 %s53, 7
      %v96 = vstv %s95
      %vm97 = vcmp.eq.s32.totalorder %v45, %v96
      %s98 = sld [smem:[#allocation2 + %s95]]
      %v99 = vstv %s98
      %v100 = vsel %vm97, %v99, %v94
    $region22: #{tpu_custom_call.1} parent=1 // loop_footer
      %s51 = sadd.s32 1, %s47
    $region23: #{tpu_custom_call.1} parent=1 // loop_footer_branch
      %46 = sbr.rel target = $region19
    $region24: #{tpu_custom_call.1} parent=1 // loop_exit
      _
    %vm101 = vcmp.eq.s32.totalorder %v45, 1000
    %s102 = sld [smem:[#allocation2 + $0x3e8]]
    %v103 = vstv %s102
    %v104 = vsel %vm101, %v103, %v52
    %105 = vst [vmem:[#allocation7] sm:$0xff] %v104
    // Predicated region
    $region25: #{tpu_custom_call.1} parent=1 // pred_check
      _
    $region26: #{tpu_custom_call.1} parent=1 // pred_check_branch
      %107 = sbr.rel (0) target = $region28
    $region27: #{tpu_custom_call.1} parent=1 // pred_region
      %109 = vsyncadd [#allocation4], 0
      %s111 = sshll.u32 [#allocation7], 4
      %s112 = int_to_ptr.vmem [resolvable:$true] %s111
      %s113 = sshll.u32 %s2, 4
      %s114 = int_to_ptr.hbm [resolvable:$true] %s113
      %116 = dma.vmem_to_hbm [thread:$0]  %s112, 128, %s114, [#allocation4]
    $region28: #{tpu_custom_call.1} parent=1 // pred_fallthru
      _
    // Predicated region
    $region29: #{tpu_custom_call.1} parent=1 // pred_check
      _
    $region30: #{tpu_custom_call.1} parent=1 // pred_check_branch
      %118 = sbr.rel (0) target = $region32
    $region31: #{tpu_custom_call.1} parent=1 // pred_region
      %120 = dma.done [#allocation4], 128
    $region32: #{tpu_custom_call.1} parent=1 // pred_fallthru
      _
    %121 = vsyncpa [#allocation3], 1
    %122 = vsyncpa [#allocation4], 1
    %123 = vsyncpa [#allocation5], 1

</llo_original>
